<compile_context>
chip_gen: v5e
topology: v5e:2x2
jax: 0.10.0
libtpu: 0.0.40
codegen_flags: <defaults>
</compile_context>

<pallas_src>
from functools import partial

import jax
import jax.numpy as jnp
from jax import lax
from jax.experimental import pallas as pl
from jax.experimental.pallas import tpu as pltpu


_CONV_CHANNELS = (32, 64, 64, 128)   # Conv1d output channels (from the PyTorch module)
_LANES = 128                         # lane width of packed-parameter tensor and scratch


def _round_up(n, m):
    return -(-n // m) * m


def _layout(input_shape, outputs_count):
    """Static layout shared by pack_params / create_forward / kernel."""
    c_in, L = input_shape
    assert L % 16 == 0, "length must be divisible by 16 (4 stride-2 convs)"
    out_f = int(outputs_count[0])
    assert out_f <= _LANES and max(_CONV_CHANNELS) <= _LANES

    conv_dims = []
    ci = c_in
    for co in _CONV_CHANNELS:
        conv_dims.append((ci, co))
        ci = co
    fc_width = L // 16

    offsets = {}
    cur = 0

    def alloc(name, nrows):
        nonlocal cur
        offsets[name] = cur
        cur += _round_up(nrows, 8)          # keep every parameter band 8-row aligned

    for i, (cin, _cout) in enumerate(conv_dims):
        alloc(f"w{i}", 3 * cin)
        alloc(f"b{i}", 1)
    alloc("wfc", fc_width * _CONV_CHANNELS[-1])
    alloc("bfc", 1)
    return tuple(conv_dims), fc_width, out_f, offsets, cur


# ----------------------------- Fused Pallas kernel -----------------------------

def _create_kernel(x_ref, p_ref, o_ref, act_ref, *, batch, length, conv_dims,
                   fc_width, out_f, offsets):
    """Whole forward pass, everything VMEM resident.

    x_ref:   (B, C_in, L)   raw input (PyTorch layout; transposed in-kernel)
    p_ref:   (P, 128)       all weights/biases packed into one tensor
    o_ref:   (B, out_f)
    act_ref: (rows, 128)    f32 scratch: row 2 + b*L_i + p holds (sample b, pos p);
                            rows 0..1 stay zero and act as the conv left pad.
    """
    B, L = batch, length
    c0 = conv_dims[0][0]

    # Zero pad rows (row 1 is read as the left pad of sample 0 by every layer).
    act_ref[0:2, :] = jnp.zeros((2, act_ref.shape[1]), jnp.float32)

    # Input transpose (C_in, L) -> (L, C_in) folded into the MXU: xt = eye_L @ x_b^T.
    # Exact: eye is 0/1, and bf16 operand rounding here is idempotent with the
    # first conv matmul's own rounding.
    rr = lax.broadcasted_iota(jnp.int32, (L, L), 0)
    cc = lax.broadcasted_iota(jnp.int32, (L, L), 1)
    eye = (rr == cc).astype(jnp.float32)
    for b in range(B):
        xt = lax.dot_general(eye, x_ref[b], (((1,), (1,)), ((), ())),
                             preferred_element_type=jnp.float32)      # (L, C_in)
        act_ref[2 + b * L:2 + (b + 1) * L, 0:c0] = xt

    # 4 x [conv(k=3, s=2, p=1) + bias + ReLU], one batched matmul per layer.
    li = L
    for i, (cin, cout) in enumerate(conv_dims):
        lo = li // 2
        nout = B * lo
        # Output row r = b*lo + j reads input positions 2j-1, 2j, 2j+1 of sample b,
        # i.e. scratch rows 2r+1, 2r+2, 2r+3 (row 1 is the zero left pad for b=0).
        tap0 = act_ref[pl.ds(1, nout, stride=2), 0:cin]
        tap1 = act_ref[pl.ds(2, nout, stride=2), 0:cin]
        tap2 = act_ref[pl.ds(3, nout, stride=2), 0:cin]
        if B > 1:
            # Row j=0 of samples b>=1 must see the zero pad, not the previous
            # sample's last position.
            ridx = lax.broadcasted_iota(jnp.int32, (nout, cin), 0)
            is_pad = ridx == lo
            for bb in range(2, B):
                is_pad = jnp.logical_or(is_pad, ridx == bb * lo)
            tap0 = jnp.where(is_pad, 0.0, tap0)

        gathered = jnp.concatenate([tap0, tap1, tap2], axis=1)        # (nout, 3*cin)
        w = p_ref[offsets[f"w{i}"]:offsets[f"w{i}"] + 3 * cin, 0:cout]
        bias = p_ref[offsets[f"b{i}"]:offsets[f"b{i}"] + 1, 0:cout]
        z = jnp.dot(gathered, w, preferred_element_type=jnp.float32)  # (nout, cout)
        h = jnp.maximum(z + bias, 0.0)                                # bias fused in ReLU
        # Dropout(p=0.01): identity in eval/inference mode.
        act_ref[2:2 + nout, 0:cout] = h
        li = lo

    # Flatten (PyTorch channel-major order) + single FC matmul.
    fw = fc_width
    c_last = conv_dims[-1][1]
    if fw == 1:
        h_flat = act_ref[2:2 + B, 0:c_last]                           # (B, 128)
    else:
        pieces = [act_ref[pl.ds(2 + j, B, stride=fw), 0:c_last] for j in range(fw)]
        h_flat = jnp.concatenate(pieces, axis=1)                      # (B, fw*128)
    wfc = p_ref[offsets["wfc"]:offsets["wfc"] + fw * c_last, 0:out_f]
    bfc = p_ref[offsets["bfc"]:offsets["bfc"] + 1, 0:out_f]
    o_ref[...] = (jnp.dot(h_flat, wfc, preferred_element_type=jnp.float32)
                  + bfc).astype(o_ref.dtype)


def create_forward(packed, x, *, input_shape, outputs_count):
    """x: (B, C_in, L) float32 -> (B, outputs_count[0]) float32."""
    conv_dims, fc_width, out_f, offsets, _total_rows = _layout(input_shape, outputs_count)
    B, c_in, L = x.shape
    assert (c_in, L) == tuple(input_shape), (x.shape, input_shape)
    scratch_rows = _round_up(2 + B * L, 8)

    kernel = partial(_create_kernel, batch=B, length=L, conv_dims=conv_dims,
                     fc_width=fc_width, out_f=out_f, offsets=offsets)
    return pl.pallas_call(
        kernel,
        out_shape=jax.ShapeDtypeStruct((B, out_f), jnp.float32),
        in_specs=[pl.BlockSpec(memory_space=pltpu.MemorySpace.VMEM),
                  pl.BlockSpec(memory_space=pltpu.MemorySpace.VMEM)],
        out_specs=pl.BlockSpec(memory_space=pltpu.MemorySpace.VMEM),
        scratch_shapes=[pltpu.VMEM((scratch_rows, _LANES), jnp.float32)],
    )(x.astype(jnp.float32), packed)


# ----------------------------- Parameter init / packing -----------------------------

def _xavier_uniform(key, shape, fan_in, fan_out):
    bound = (6.0 / (fan_in + fan_out)) ** 0.5
    return jax.random.uniform(key, shape, jnp.float32, -bound, bound)


def _default_bias(key, shape, fan_in):
    bound = 1.0 / (fan_in ** 0.5)
    return jax.random.uniform(key, shape, jnp.float32, -bound, bound)


def init_params(key, input_shape, outputs_count):
    """PyTorch-layout parameters (Conv1d: (C_out, C_in, 3); Linear: (out_f, in_f))."""
    conv_dims, fc_width, out_f, _offs, _rows = _layout(input_shape, outputs_count)
    params = {}
    for i, (ci, co) in enumerate(conv_dims):
        key, kw, kb = jax.random.split(key, 3)
        params[f"conv{i}_w"] = _xavier_uniform(kw, (co, ci, 3), fan_in=ci * 3, fan_out=co * 3)
        params[f"conv{i}_b"] = _default_bias(kb, (co,), fan_in=ci * 3)
    key, kw, kb = jax.random.split(key, 3)
    in_f = conv_dims[-1][1] * fc_width
    params["fc_w"] = _xavier_uniform(kw, (out_f, in_f), fan_in=in_f, fan_out=out_f)
    params["fc_b"] = _default_bias(kb, (out_f,), fan_in=in_f)
    return params


def pack_params(params, input_shape, outputs_count):
    """One-time re-layout of every parameter into a single (rows, 128) f32 tensor
    in matmul-ready form (hoisted off the forward path)."""
    conv_dims, fc_width, out_f, offsets, total_rows = _layout(input_shape, outputs_count)
    c_last = conv_dims[-1][1]
    packed = jnp.zeros((total_rows, _LANES), jnp.float32)
    for i, (ci, co) in enumerate(conv_dims):
        w = params[f"conv{i}_w"].astype(jnp.float32)                  # (co, ci, 3)
        w2 = jnp.transpose(w, (2, 1, 0)).reshape(3 * ci, co)          # row = k*ci + c_in
        packed = packed.at[offsets[f"w{i}"]:offsets[f"w{i}"] + 3 * ci, 0:co].set(w2)
        b = params[f"conv{i}_b"].astype(jnp.float32).reshape(1, co)
        packed = packed.at[offsets[f"b{i}"]:offsets[f"b{i}"] + 1, 0:co].set(b)
    fc_w = params["fc_w"].astype(jnp.float32)                         # (out_f, c_last*fw)
    # Kernel flatten order is j*128 + c; PyTorch's .view flatten of (C, L') is c*fw + j.
    w3 = jnp.transpose(fc_w.reshape(out_f, c_last, fc_width), (2, 1, 0)
                       ).reshape(fc_width * c_last, out_f)
    packed = packed.at[offsets["wfc"]:offsets["wfc"] + fc_width * c_last, 0:out_f].set(w3)
    fc_b = params["fc_b"].astype(jnp.float32).reshape(1, out_f)
    packed = packed.at[offsets["bfc"]:offsets["bfc"] + 1, 0:out_f].set(fc_b)
    return packed


# ----------------------------- Pure-JAX reference (verification) -----------------------------

def _reference_forward(params, x):
    h = x
    for i in range(4):
        w = params[f"conv{i}_w"]
        b = params[f"conv{i}_b"]
        h = jax.lax.conv_general_dilated(
            h, w, window_strides=(2,), padding=[(1, 1)],
            dimension_numbers=("NCH", "OIH", "NCH"))
        h = jnp.maximum(h + b[None, :, None], 0.0)
    flat = h.reshape(h.shape[0], -1)
    return flat @ params["fc_w"].T + params["fc_b"]


# ----------------------------- Main -----------------------------

if __name__ == "__main__":
    key = jax.random.PRNGKey(0)
    input_shape = (4, 32)        # (channels, length); fc_width = 32 // 16 = 2
    outputs_count = (8,)
    batch = 2

    k_params, k_x = jax.random.split(key)
    params = init_params(k_params, input_shape, outputs_count)
    packed = pack_params(params, input_shape, outputs_count)
    x = jax.random.normal(k_x, (batch, input_shape[0], input_shape[1]), jnp.float32)

    fwd = jax.jit(partial(create_forward, input_shape=input_shape,
                          outputs_count=outputs_count))
    out = jax.block_until_ready(fwd(packed, x))

    assert out.shape == (batch, outputs_count[0]), out.shape
    assert out.dtype == jnp.float32

    ref = _reference_forward(params, x)
    max_err = float(jnp.max(jnp.abs(out - ref)))
    assert jnp.allclose(out, ref, rtol=1e-2, atol=1e-2), max_err

    print("KERNEL_OK")
</pallas_src>

<mosaic_0001>
module attributes {stable_mosaic.version = 11 : i64} {
  func.func @_create_kernel(%arg0: memref<2x4x32xf32, #tpu.memory_space<vmem>>, %arg1: memref<792x128xf32, #tpu.memory_space<vmem>>, %arg2: memref<2x8xf32, #tpu.memory_space<vmem>>, %arg3: memref<72x128xf32, #tpu.memory_space<vmem>>) attributes {dimension_semantics = [], scalar_prefetch = 0 : i64, scratch_operands = 1 : i64, tpu.core_type = #tpu.core_type<tc>} {
    %cst = arith.constant 0.000000e+00 : f32
    %0 = vector.broadcast %cst : f32 to vector<2x128xf32>
    %c0 = arith.constant 0 : index
    %c0_0 = arith.constant 0 : index
    %1 = vector.load %arg3[%c0, %c0_0] : memref<72x128xf32, #tpu.memory_space<vmem>>, vector<2x128xf32>
    tpu.vector_store %arg3[%c0, %c0_0], %0 {strides = array<i32>} : memref<72x128xf32, #tpu.memory_space<vmem>>, vector<2x128xf32>,
    %2 = tpu.iota {dimensions = array<i32: 0>} : vector<32x32xi32>
    %3 = tpu.iota {dimensions = array<i32: 1>} : vector<32x32xi32>
    %4 = arith.cmpi eq, %2, %3 : vector<32x32xi32>
    %5 = arith.extui %4 : vector<32x32xi1> to vector<32x32xi32>
    %6 = arith.sitofp %5 : vector<32x32xi32> to vector<32x32xf32>
    %c0_1 = arith.constant 0 : index
    %c0_2 = arith.constant 0 : index
    %c0_3 = arith.constant 0 : index
    %7 = vector.load %arg0[%c0_1, %c0_2, %c0_3] : memref<2x4x32xf32, #tpu.memory_space<vmem>>, vector<1x4x32xf32>
    %8 = vector.shape_cast %7 : vector<1x4x32xf32> to vector<4x32xf32>
    %cst_4 = arith.constant dense<0.000000e+00> : vector<32x4xf32>
    %9 = tpu.matmul %6, %8, %cst_4 {dimension_numbers = #tpu.dot_dimension_numbers<[1], [1], [0], [0], [0, 0, 1, 0], [], []>} : vector<32x32xf32>, vector<4x32xf32>, vector<32x4xf32> -> vector<32x4xf32>
    %c2 = arith.constant 2 : index
    %c0_5 = arith.constant 0 : index
    %10 = vector.load %arg3[%c2, %c0_5] : memref<72x128xf32, #tpu.memory_space<vmem>>, vector<32x4xf32>
    tpu.vector_store %arg3[%c2, %c0_5], %9 {strides = array<i32>} : memref<72x128xf32, #tpu.memory_space<vmem>>, vector<32x4xf32>,
    %c1 = arith.constant 1 : index
    %c0_6 = arith.constant 0 : index
    %c0_7 = arith.constant 0 : index
    %11 = vector.load %arg0[%c1, %c0_6, %c0_7] : memref<2x4x32xf32, #tpu.memory_space<vmem>>, vector<1x4x32xf32>
    %12 = vector.shape_cast %11 : vector<1x4x32xf32> to vector<4x32xf32>
    %cst_8 = arith.constant dense<0.000000e+00> : vector<32x4xf32>
    %13 = tpu.matmul %6, %12, %cst_8 {dimension_numbers = #tpu.dot_dimension_numbers<[1], [1], [0], [0], [0, 0, 1, 0], [], []>} : vector<32x32xf32>, vector<4x32xf32>, vector<32x4xf32> -> vector<32x4xf32>
    %c34 = arith.constant 34 : index
    %c0_9 = arith.constant 0 : index
    %14 = vector.load %arg3[%c34, %c0_9] : memref<72x128xf32, #tpu.memory_space<vmem>>, vector<32x4xf32>
    tpu.vector_store %arg3[%c34, %c0_9], %13 {strides = array<i32>} : memref<72x128xf32, #tpu.memory_space<vmem>>, vector<32x4xf32>,
    %c1_10 = arith.constant 1 : index
    %c0_11 = arith.constant 0 : index
    %15 = tpu.strided_load %arg3[%c1_10, %c0_11] {strides = array<i32: 2, 1>} : memref<72x128xf32, #tpu.memory_space<vmem>>, vector<32x4xf32>
    %c2_12 = arith.constant 2 : index
    %c0_13 = arith.constant 0 : index
    %16 = tpu.strided_load %arg3[%c2_12, %c0_13] {strides = array<i32: 2, 1>} : memref<72x128xf32, #tpu.memory_space<vmem>>, vector<32x4xf32>
    %c3 = arith.constant 3 : index
    %c0_14 = arith.constant 0 : index
    %17 = tpu.strided_load %arg3[%c3, %c0_14] {strides = array<i32: 2, 1>} : memref<72x128xf32, #tpu.memory_space<vmem>>, vector<32x4xf32>
    %18 = tpu.iota {dimensions = array<i32: 0>} : vector<32x4xi32>
    %c16_i32 = arith.constant 16 : i32
    %19 = vector.broadcast %c16_i32 : i32 to vector<32x4xi32>
    %20 = arith.cmpi eq, %18, %19 : vector<32x4xi32>
    %cst_15 = arith.constant 0.000000e+00 : f32
    %21 = vector.broadcast %cst_15 : f32 to vector<32x4xf32>
    %22 = arith.select %20, %21, %15 : vector<32x4xi1>, vector<32x4xf32>
    %23 = tpu.concatenate %22, %16, %17 in 1 : vector<32x4xf32>, vector<32x4xf32>, vector<32x4xf32> -> vector<32x12xf32>
    %c0_16 = arith.constant 0 : index
    %c0_17 = arith.constant 0 : index
    %24 = vector.load %arg1[%c0_16, %c0_17] : memref<792x128xf32, #tpu.memory_space<vmem>>, vector<12x32xf32>
    %c16 = arith.constant 16 : index
    %c0_18 = arith.constant 0 : index
    %25 = vector.load %arg1[%c16, %c0_18] : memref<792x128xf32, #tpu.memory_space<vmem>>, vector<1x32xf32>
    %cst_19 = arith.constant dense<0.000000e+00> : vector<32x32xf32>
    %26 = tpu.matmul %23, %24, %cst_19 {dimension_numbers = #tpu.dot_dimension_numbers<[1], [0], [0], [1], [0, 0, 1, 1], [], []>} : vector<32x12xf32>, vector<12x32xf32>, vector<32x32xf32> -> vector<32x32xf32>
    %27 = vector.broadcast %25 : vector<1x32xf32> to vector<32x32xf32>
    %28 = arith.addf %26, %27 : vector<32x32xf32>
    %cst_20 = arith.constant 0.000000e+00 : f32
    %29 = vector.broadcast %cst_20 : f32 to vector<32x32xf32>
    %30 = arith.maximumf %28, %29 : vector<32x32xf32>
    %c2_21 = arith.constant 2 : index
    %c0_22 = arith.constant 0 : index
    %31 = vector.load %arg3[%c2_21, %c0_22] : memref<72x128xf32, #tpu.memory_space<vmem>>, vector<32x32xf32>
    tpu.vector_store %arg3[%c2_21, %c0_22], %30 {strides = array<i32>} : memref<72x128xf32, #tpu.memory_space<vmem>>, vector<32x32xf32>,
    %c1_23 = arith.constant 1 : index
    %c0_24 = arith.constant 0 : index
    %32 = tpu.strided_load %arg3[%c1_23, %c0_24] {strides = array<i32: 2, 1>} : memref<72x128xf32, #tpu.memory_space<vmem>>, vector<16x32xf32>
    %c2_25 = arith.constant 2 : index
    %c0_26 = arith.constant 0 : index
    %33 = tpu.strided_load %arg3[%c2_25, %c0_26] {strides = array<i32: 2, 1>} : memref<72x128xf32, #tpu.memory_space<vmem>>, vector<16x32xf32>
    %c3_27 = arith.constant 3 : index
    %c0_28 = arith.constant 0 : index
    %34 = tpu.strided_load %arg3[%c3_27, %c0_28] {strides = array<i32: 2, 1>} : memref<72x128xf32, #tpu.memory_space<vmem>>, vector<16x32xf32>
    %35 = tpu.iota {dimensions = array<i32: 0>} : vector<16x32xi32>
    %c8_i32 = arith.constant 8 : i32
    %36 = vector.broadcast %c8_i32 : i32 to vector<16x32xi32>
    %37 = arith.cmpi eq, %35, %36 : vector<16x32xi32>
    %cst_29 = arith.constant 0.000000e+00 : f32
    %38 = vector.broadcast %cst_29 : f32 to vector<16x32xf32>
    %39 = arith.select %37, %38, %32 : vector<16x32xi1>, vector<16x32xf32>
    %40 = tpu.concatenate %39, %33, %34 in 1 : vector<16x32xf32>, vector<16x32xf32>, vector<16x32xf32> -> vector<16x96xf32>
    %c24 = arith.constant 24 : index
    %c0_30 = arith.constant 0 : index
    %41 = vector.load %arg1[%c24, %c0_30] : memref<792x128xf32, #tpu.memory_space<vmem>>, vector<96x64xf32>
    %c120 = arith.constant 120 : index
    %c0_31 = arith.constant 0 : index
    %42 = vector.load %arg1[%c120, %c0_31] : memref<792x128xf32, #tpu.memory_space<vmem>>, vector<1x64xf32>
    %cst_32 = arith.constant dense<0.000000e+00> : vector<16x64xf32>
    %43 = tpu.matmul %40, %41, %cst_32 {dimension_numbers = #tpu.dot_dimension_numbers<[1], [0], [0], [1], [0, 0, 1, 1], [], []>} : vector<16x96xf32>, vector<96x64xf32>, vector<16x64xf32> -> vector<16x64xf32>
    %44 = vector.broadcast %42 : vector<1x64xf32> to vector<16x64xf32>
    %45 = arith.addf %43, %44 : vector<16x64xf32>
    %cst_33 = arith.constant 0.000000e+00 : f32
    %46 = vector.broadcast %cst_33 : f32 to vector<16x64xf32>
    %47 = arith.maximumf %45, %46 : vector<16x64xf32>
    %c2_34 = arith.constant 2 : index
    %c0_35 = arith.constant 0 : index
    %48 = vector.load %arg3[%c2_34, %c0_35] : memref<72x128xf32, #tpu.memory_space<vmem>>, vector<16x64xf32>
    tpu.vector_store %arg3[%c2_34, %c0_35], %47 {strides = array<i32>} : memref<72x128xf32, #tpu.memory_space<vmem>>, vector<16x64xf32>,
    %c1_36 = arith.constant 1 : index
    %c0_37 = arith.constant 0 : index
    %49 = tpu.strided_load %arg3[%c1_36, %c0_37] {strides = array<i32: 2, 1>} : memref<72x128xf32, #tpu.memory_space<vmem>>, vector<8x64xf32>
    %c2_38 = arith.constant 2 : index
    %c0_39 = arith.constant 0 : index
    %50 = tpu.strided_load %arg3[%c2_38, %c0_39] {strides = array<i32: 2, 1>} : memref<72x128xf32, #tpu.memory_space<vmem>>, vector<8x64xf32>
    %c3_40 = arith.constant 3 : index
    %c0_41 = arith.constant 0 : index
    %51 = tpu.strided_load %arg3[%c3_40, %c0_41] {strides = array<i32: 2, 1>} : memref<72x128xf32, #tpu.memory_space<vmem>>, vector<8x64xf32>
    %52 = tpu.iota {dimensions = array<i32: 0>} : vector<8x64xi32>
    %c4_i32 = arith.constant 4 : i32
    %53 = vector.broadcast %c4_i32 : i32 to vector<8x64xi32>
    %54 = arith.cmpi eq, %52, %53 : vector<8x64xi32>
    %cst_42 = arith.constant 0.000000e+00 : f32
    %55 = vector.broadcast %cst_42 : f32 to vector<8x64xf32>
    %56 = arith.select %54, %55, %49 : vector<8x64xi1>, vector<8x64xf32>
    %57 = tpu.concatenate %56, %50, %51 in 1 : vector<8x64xf32>, vector<8x64xf32>, vector<8x64xf32> -> vector<8x192xf32>
    %c128 = arith.constant 128 : index
    %c0_43 = arith.constant 0 : index
    %58 = vector.load %arg1[%c128, %c0_43] : memref<792x128xf32, #tpu.memory_space<vmem>>, vector<192x64xf32>
    %c320 = arith.constant 320 : index
    %c0_44 = arith.constant 0 : index
    %59 = vector.load %arg1[%c320, %c0_44] : memref<792x128xf32, #tpu.memory_space<vmem>>, vector<1x64xf32>
    %cst_45 = arith.constant dense<0.000000e+00> : vector<8x64xf32>
    %60 = tpu.matmul %57, %58, %cst_45 {dimension_numbers = #tpu.dot_dimension_numbers<[1], [0], [0], [1], [0, 0, 1, 1], [], []>} : vector<8x192xf32>, vector<192x64xf32>, vector<8x64xf32> -> vector<8x64xf32>
    %61 = vector.broadcast %59 : vector<1x64xf32> to vector<8x64xf32>
    %62 = arith.addf %60, %61 : vector<8x64xf32>
    %cst_46 = arith.constant 0.000000e+00 : f32
    %63 = vector.broadcast %cst_46 : f32 to vector<8x64xf32>
    %64 = arith.maximumf %62, %63 : vector<8x64xf32>
    %c2_47 = arith.constant 2 : index
    %c0_48 = arith.constant 0 : index
    %65 = vector.load %arg3[%c2_47, %c0_48] : memref<72x128xf32, #tpu.memory_space<vmem>>, vector<8x64xf32>
    tpu.vector_store %arg3[%c2_47, %c0_48], %64 {strides = array<i32>} : memref<72x128xf32, #tpu.memory_space<vmem>>, vector<8x64xf32>,
    %c1_49 = arith.constant 1 : index
    %c0_50 = arith.constant 0 : index
    %66 = tpu.strided_load %arg3[%c1_49, %c0_50] {strides = array<i32: 2, 1>} : memref<72x128xf32, #tpu.memory_space<vmem>>, vector<4x64xf32>
    %c2_51 = arith.constant 2 : index
    %c0_52 = arith.constant 0 : index
    %67 = tpu.strided_load %arg3[%c2_51, %c0_52] {strides = array<i32: 2, 1>} : memref<72x128xf32, #tpu.memory_space<vmem>>, vector<4x64xf32>
    %c3_53 = arith.constant 3 : index
    %c0_54 = arith.constant 0 : index
    %68 = tpu.strided_load %arg3[%c3_53, %c0_54] {strides = array<i32: 2, 1>} : memref<72x128xf32, #tpu.memory_space<vmem>>, vector<4x64xf32>
    %69 = tpu.iota {dimensions = array<i32: 0>} : vector<4x64xi32>
    %c2_i32 = arith.constant 2 : i32
    %70 = vector.broadcast %c2_i32 : i32 to vector<4x64xi32>
    %71 = arith.cmpi eq, %69, %70 : vector<4x64xi32>
    %cst_55 = arith.constant 0.000000e+00 : f32
    %72 = vector.broadcast %cst_55 : f32 to vector<4x64xf32>
    %73 = arith.select %71, %72, %66 : vector<4x64xi1>, vector<4x64xf32>
    %74 = tpu.concatenate %73, %67, %68 in 1 : vector<4x64xf32>, vector<4x64xf32>, vector<4x64xf32> -> vector<4x192xf32>
    %c328 = arith.constant 328 : index
    %c0_56 = arith.constant 0 : index
    %75 = vector.load %arg1[%c328, %c0_56] : memref<792x128xf32, #tpu.memory_space<vmem>>, vector<192x128xf32>
    %c520 = arith.constant 520 : index
    %c0_57 = arith.constant 0 : index
    %76 = vector.load %arg1[%c520, %c0_57] : memref<792x128xf32, #tpu.memory_space<vmem>>, vector<1x128xf32>
    %cst_58 = arith.constant dense<0.000000e+00> : vector<4x128xf32>
    %77 = tpu.matmul %74, %75, %cst_58 {dimension_numbers = #tpu.dot_dimension_numbers<[1], [0], [0], [1], [0, 0, 1, 1], [], []>} : vector<4x192xf32>, vector<192x128xf32>, vector<4x128xf32> -> vector<4x128xf32>
    %78 = vector.broadcast %76 : vector<1x128xf32> to vector<4x128xf32>
    %79 = arith.addf %77, %78 : vector<4x128xf32>
    %cst_59 = arith.constant 0.000000e+00 : f32
    %80 = vector.broadcast %cst_59 : f32 to vector<4x128xf32>
    %81 = arith.maximumf %79, %80 : vector<4x128xf32>
    %c2_60 = arith.constant 2 : index
    %c0_61 = arith.constant 0 : index
    %82 = vector.load %arg3[%c2_60, %c0_61] : memref<72x128xf32, #tpu.memory_space<vmem>>, vector<4x128xf32>
    tpu.vector_store %arg3[%c2_60, %c0_61], %81 {strides = array<i32>} : memref<72x128xf32, #tpu.memory_space<vmem>>, vector<4x128xf32>,
    %c2_62 = arith.constant 2 : index
    %c0_63 = arith.constant 0 : index
    %83 = tpu.strided_load %arg3[%c2_62, %c0_63] {strides = array<i32: 2, 1>} : memref<72x128xf32, #tpu.memory_space<vmem>>, vector<2x128xf32>
    %c3_64 = arith.constant 3 : index
    %c0_65 = arith.constant 0 : index
    %84 = tpu.strided_load %arg3[%c3_64, %c0_65] {strides = array<i32: 2, 1>} : memref<72x128xf32, #tpu.memory_space<vmem>>, vector<2x128xf32>
    %85 = tpu.concatenate %83, %84 in 1 : vector<2x128xf32>, vector<2x128xf32> -> vector<2x256xf32>
    %c528 = arith.constant 528 : index
    %c0_66 = arith.constant 0 : index
    %86 = vector.load %arg1[%c528, %c0_66] : memref<792x128xf32, #tpu.memory_space<vmem>>, vector<256x8xf32>
    %c784 = arith.constant 784 : index
    %c0_67 = arith.constant 0 : index
    %87 = vector.load %arg1[%c784, %c0_67] : memref<792x128xf32, #tpu.memory_space<vmem>>, vector<1x8xf32>
    %cst_68 = arith.constant dense<0.000000e+00> : vector<2x8xf32>
    %88 = tpu.matmul %85, %86, %cst_68 {dimension_numbers = #tpu.dot_dimension_numbers<[1], [0], [0], [1], [0, 0, 1, 1], [], []>} : vector<2x256xf32>, vector<256x8xf32>, vector<2x8xf32> -> vector<2x8xf32>
    %89 = vector.broadcast %87 : vector<1x8xf32> to vector<2x8xf32>
    %90 = arith.addf %88, %89 : vector<2x8xf32>
    %c0_69 = arith.constant 0 : index
    %c0_70 = arith.constant 0 : index
    %91 = vector.load %arg2[%c0_69, %c0_70] : memref<2x8xf32, #tpu.memory_space<vmem>>, vector<2x8xf32>
    tpu.vector_store %arg2[%c0_69, %c0_70], %90 {strides = array<i32>} : memref<2x8xf32, #tpu.memory_space<vmem>>, vector<2x8xf32>,
    return
  }
}

</mosaic_0001>

<llo_original>
// kernel: create_forward.1
$region0: #{create_forward.1}
  #allocation0 [shape = 'u32[]', space=smem, size = 0x4, offset = 0x4, fixed_abs, tag = 'smem constant byte address 0x4 - core index']
  #allocation1 [shape = 'u32[72,128]{1,0:T(1,128)}', space=vmem, size = 0x9000, scoped, tag = 'internal scratch']
  #allocation2 [shape = 'f32[72,128]{1,0:T(8,128)}', space=vmem, size = 0x9000, scoped, tag = 'scratch operand']
  %s0 = inlined_call_operand.hbm [shape: f32[2,4,32], index: 0, kind: input, shape index: {}]
  %s1 = inlined_call_operand.hbm [shape: f32[792,128], index: 1, kind: input, shape index: {}]
  %s2 = inlined_call_operand.hbm [shape: f32[2,8], index: 2, kind: output, shape index: {}]
  %s3 = sld [smem:[#allocation0]]
  $region26: #{create_forward.1} parent=0
    _
  %s5 = ssub.s32 1, %s3
  %s6 = scalar_select 0, %s5, %s3
  $region1: #{create_forward.1} parent=0
    #allocation3 [shape = 'u8[4096]{0}', space=vmem, size = 0x1000, scoped, tag = 'input window, operand 0, single buffered']
    #allocation4 [shape = 's32[1]{0}', space=sflag, size = 0x4, scoped, tag = 'scoped memory for create_forward.1']
    #allocation5 [shape = 's32[1]{0}', space=sflag, size = 0x4, scoped, tag = 'scoped memory for create_forward.1']
    #allocation6 [shape = 'u8[405504]{0}', space=vmem, size = 0x63000, scoped, tag = 'input window, operand 1, single buffered']
    #allocation7 [shape = 's32[1]{0}', space=sflag, size = 0x4, scoped, tag = 'scoped memory for create_forward.1']
    #allocation8 [shape = 'u8[1024]{0}', space=vmem, size = 0x400, scoped, tag = 'output window, operand 0, single buffered']
    %7 = vsyncpa [#allocation4], 0
    %8 = vsyncpa [#allocation7], 0
    %9 = vsyncpa [#allocation5], 0
    // Predicated region
    $region2: #{create_forward.1} parent=1 // pred_check
      _
    $region3: #{create_forward.1} parent=1 // pred_check_branch
      %11 = sbr.rel (0) target = $region5
    $region4: #{create_forward.1} parent=1 // pred_region
      %13 = vsyncadd [#allocation4], 0
      %s14 = sshll.u32 %s0, 4
      %s15 = int_to_ptr.hbm [resolvable:$true] %s14
      %s16 = sshll.u32 [#allocation3], 4
      %s17 = int_to_ptr.vmem [resolvable:$true] %s16
      %22 = dma.hbm_to_vmem [thread:$0]  %s15, 128, %s17, [#allocation4], 64, 64, 4
    $region5: #{create_forward.1} parent=1 // pred_fallthru
      _
    // Predicated region
    $region6: #{create_forward.1} parent=1 // pred_check
      _
    $region7: #{create_forward.1} parent=1 // pred_check_branch
      %24 = sbr.rel (0) target = $region9
    $region8: #{create_forward.1} parent=1 // pred_region
      %26 = vsyncadd [#allocation7], 0
      %s27 = sshll.u32 %s1, 4
      %s28 = int_to_ptr.hbm [resolvable:$true] %s27
      %s29 = sshll.u32 [#allocation6], 4
      %s30 = int_to_ptr.vmem [resolvable:$true] %s29
      %35 = dma.hbm_to_vmem [thread:$0]  %s28, 12672, %s30, [#allocation7], 128, 128, 8
    $region9: #{create_forward.1} parent=1 // pred_fallthru
      _
    // Predicated region
    $region10: #{create_forward.1} parent=1 // pred_check
      _
    $region11: #{create_forward.1} parent=1 // pred_check_branch
      %37 = sbr.rel (0) target = $region13
    $region12: #{create_forward.1} parent=1 // pred_region
      %39 = dma.done [#allocation4], 128
    $region13: #{create_forward.1} parent=1 // pred_fallthru
      _
    // Predicated region
    $region14: #{create_forward.1} parent=1 // pred_check
      _
    $region15: #{create_forward.1} parent=1 // pred_check_branch
      %41 = sbr.rel (0) target = $region17
    $region16: #{create_forward.1} parent=1 // pred_region
      %43 = dma.done [#allocation7], 12672
    $region17: #{create_forward.1} parent=1 // pred_fallthru
      _
    %44 = vst [vmem:[#allocation2] sm:$0x3] 0.0
    %v45 = vlaneseq
    %v46 = vshrl.u32 %v45, 7
    %v47 = vadd.s32 %v46, 8
    %v48 = vadd.s32 %v46, 16
    %v49 = vadd.s32 %v46, 24
    %v50 = vlaneseq
    %v51 = vand.u32 %v50, 127
    %vm52 = vcmp.eq.s32.totalorder %v46, %v51
    %vm53 = vcmp.eq.s32.totalorder %v47, %v51
    %vm54 = vcmp.eq.s32.totalorder %v48, %v51
    %vm55 = vcmp.eq.s32.totalorder %v49, %v51
    %v56 = vsel %vm52, 1, 0
    %v57 = vsel %vm53, 1, 0
    %v58 = vsel %vm54, 1, 0
    %v59 = vsel %vm55, 1, 0
    %v60 = vcvt.s32.f32 %v56
    %v61 = vcvt.s32.f32 %v57
    %v62 = vcvt.s32.f32 %v58
    %v63 = vcvt.s32.f32 %v59
    %v64 = vld [vmem:[#allocation3] sm:$0xf]
    %vm65 = vcmask 261120
    %v67 = vsel %vm65, %v60, 0
    %v70 = vsel %vm65, %v61, 0
    %v73 = vsel %vm65, %v62, 0
    %v76 = vsel %vm65, %v63, 0
    %v79 = vsel %vm65, %v64, 0
    %81 = vmatpush.xpose.msra.mxu0 0.0
    %82 = vmatpush.xpose.msra.mxu0 0.0
    %83 = vmatpush.xpose.msra.mxu0 0.0
    %84 = vmatpush.xpose.msra.mxu0 0.0
    %85 = vmatpush.xpose.msra.mxu0 0.0
    %86 = vmatpush.xpose.msra.mxu0 0.0
    %87 = vmatpush.xpose.msra.mxu0 0.0
    %88 = vmatpush.xpose.msra.mxu0 0.0
    %89 = vmatpush.xpose.msra.mxu0 0.0
    %90 = vmatpush.xpose.msra.mxu0 0.0
    %91 = vmatpush.xpose.msra.mxu0 0.0
    %92 = vmatpush.xpose.msra.mxu0 0.0
    %93 = vmatpush.xpose.msra.mxu0 0.0
    %94 = vmatpush.xpose.msra.mxu0 0.0
    %95 = vmatpush.xpose.msra.mxu0 0.0
    %96 = vmatpush.xpose.msra.mxu0 %v79
    %97 = vmatmul.f32.gmra.mxu0 %v67
    %v98 = vpop.f32.mrf.mxu0
    %v99 = vadd.f32 0.0, %v98
    %100 = vmatmul.f32.gmra.mxu0 %v70
    %v101 = vpop.f32.mrf.mxu0
    %v102 = vadd.f32 0.0, %v101
    %103 = vmatmul.f32.gmra.mxu0 %v73
    %v104 = vpop.f32.mrf.mxu0
    %v105 = vadd.f32 0.0, %v104
    %106 = vmatmul.f32.gmra.mxu0 %v76
    %v107 = vpop.f32.mrf.mxu0
    %v108 = vadd.f32 0.0, %v107
    %109 = vdwg.mxu0
    %vm110 = vcmask 31744
    %111 = vst.msk [vmem:[#allocation2 + $0x2] sm:$0xff] %vm110, %v99
    %112 = vst.msk [vmem:[#allocation2 + $0xa] sm:$0xff] %vm110, %v102
    %113 = vst.msk [vmem:[#allocation2 + $0x12] sm:$0xff] %vm110, %v105
    %114 = vst.msk [vmem:[#allocation2 + $0x1a] sm:$0xff] %vm110, %v108
    %s115 = scalar_lea.vmem [#allocation3], 4
    %v116 = vld [vmem:[%s115] sm:$0xf]
    %v118 = vsel %vm65, %v116, 0
    %120 = vmatpush.xpose.msra.mxu0 0.0
    %121 = vmatpush.xpose.msra.mxu0 0.0
    %122 = vmatpush.xpose.msra.mxu0 0.0
    %123 = vmatpush.xpose.msra.mxu0 0.0
    %124 = vmatpush.xpose.msra.mxu0 0.0
    %125 = vmatpush.xpose.msra.mxu0 0.0
    %126 = vmatpush.xpose.msra.mxu0 0.0
    %127 = vmatpush.xpose.msra.mxu0 0.0
    %128 = vmatpush.xpose.msra.mxu0 0.0
    %129 = vmatpush.xpose.msra.mxu0 0.0
    %130 = vmatpush.xpose.msra.mxu0 0.0
    %131 = vmatpush.xpose.msra.mxu0 0.0
    %132 = vmatpush.xpose.msra.mxu0 0.0
    %133 = vmatpush.xpose.msra.mxu0 0.0
    %134 = vmatpush.xpose.msra.mxu0 0.0
    %135 = vmatpush.xpose.msra.mxu0 %v118
    %136 = vmatmul.f32.gmra.mxu0 %v67
    %v137 = vpop.f32.mrf.mxu0
    %v138 = vadd.f32 0.0, %v137
    %139 = vmatmul.f32.gmra.mxu0 %v70
    %v140 = vpop.f32.mrf.mxu0
    %v141 = vadd.f32 0.0, %v140
    %142 = vmatmul.f32.gmra.mxu0 %v73
    %v143 = vpop.f32.mrf.mxu0
    %v144 = vadd.f32 0.0, %v143
    %145 = vmatmul.f32.gmra.mxu0 %v76
    %v146 = vpop.f32.mrf.mxu0
    %v147 = vadd.f32 0.0, %v146
    %148 = vdwg.mxu0
    %149 = vst.msk [vmem:[#allocation2 + $0x22] sm:$0xff] %vm110, %v138
    %150 = vst.msk [vmem:[#allocation2 + $0x2a] sm:$0xff] %vm110, %v141
    %151 = vst.msk [vmem:[#allocation2 + $0x32] sm:$0xff] %vm110, %v144
    %152 = vst.msk [vmem:[#allocation2 + $0x3a] sm:$0xff] %vm110, %v147
    %s153 = scalar_lea.vmem [#allocation2], 1
    %v154 = vld [vmem:[%s153] ss:$2 sm:$0xff]
    %s155 = scalar_lea.vmem [#allocation2], 17
    %v156 = vld [vmem:[%s155] ss:$2 sm:$0xff]
    %s157 = scalar_lea.vmem [#allocation2], 33
    %v158 = vld [vmem:[%s157] ss:$2 sm:$0xff]
    %s159 = scalar_lea.vmem [#allocation2], 49
    %v160 = vld [vmem:[%s159] ss:$2 sm:$0xff]
    %s161 = scalar_lea.vmem [#allocation2], 2
    %v162 = vld [vmem:[%s161] ss:$2 sm:$0xff]
    %s163 = scalar_lea.vmem [#allocation2], 18
    %v164 = vld [vmem:[%s163] ss:$2 sm:$0xff]
    %s165 = scalar_lea.vmem [#allocation2], 34
    %v166 = vld [vmem:[%s165] ss:$2 sm:$0xff]
    %s167 = scalar_lea.vmem [#allocation2], 50
    %v168 = vld [vmem:[%s167] ss:$2 sm:$0xff]
    %s169 = scalar_lea.vmem [#allocation2], 3
    %v170 = vld [vmem:[%s169] ss:$2 sm:$0xff]
    %s171 = scalar_lea.vmem [#allocation2], 19
    %v172 = vld [vmem:[%s171] ss:$2 sm:$0xff]
    %s173 = scalar_lea.vmem [#allocation2], 35
    %v174 = vld [vmem:[%s173] ss:$2 sm:$0xff]
    %s175 = scalar_lea.vmem [#allocation2], 51
    %v176 = vld [vmem:[%s175] ss:$2 sm:$0xff]
    %vm177 = vcmp.eq.s32.totalorder %v46, 16
    %vm178 = vcmp.eq.s32.totalorder %v47, 16
    %vm179 = vcmp.eq.s32.totalorder %v48, 16
    %vm180 = vcmp.eq.s32.totalorder %v49, 16
    %v181 = vsel %vm177, 0.0, %v154
    %v182 = vsel %vm178, 0.0, %v156
    %v183 = vsel %vm179, 0.0, %v158
    %v184 = vsel %vm180, 0.0, %v160
    %189 = vrot.lane.b32.xlu0 %v162, 4
    %v190 = vpop.permute.xlu0 %189
    %191 = vrot.lane.b32.xlu0 %v164, 4
    %v192 = vpop.permute.xlu0 %191
    %193 = vrot.lane.b32.xlu0 %v166, 4
    %v194 = vpop.permute.xlu0 %193
    %195 = vrot.lane.b32.xlu0 %v168, 4
    %v196 = vpop.permute.xlu0 %195
    %205 = vrot.lane.b32.xlu0 %v170, 8
    %v206 = vpop.permute.xlu0 %205
    %207 = vrot.lane.b32.xlu0 %v172, 8
    %v208 = vpop.permute.xlu0 %207
    %209 = vrot.lane.b32.xlu0 %v174, 8
    %v210 = vpop.permute.xlu0 %209
    %211 = vrot.lane.b32.xlu0 %v176, 8
    %v212 = vpop.permute.xlu0 %211
    %v217 = vsel %vm110, %v181, %v190
    %v218 = vsel %vm110, %v182, %v192
    %v219 = vsel %vm110, %v183, %v194
    %v220 = vsel %vm110, %v184, %v196
    %vm221 = vcmask 64512
    %v222 = vsel %vm221, %v217, %v206
    %v223 = vsel %vm221, %v218, %v208
    %v224 = vsel %vm221, %v219, %v210
    %v225 = vsel %vm221, %v220, %v212
    %v226 = vld [vmem:[#allocation6] sm:$0xff]
    %v227 = vld [vmem:[#allocation6 + $0x8] sm:$0xf]
    %v228 = vld [vmem:[#allocation6 + $0x10] sm:$0x1]
    %v229 = vperm.slane %v228, 0
    %vm230 = vcmask 97280
    %v232 = vsel %vm230, %v222, 0
    %v235 = vsel %vm230, %v223, 0
    %v238 = vsel %vm230, %v224, 0
    %v241 = vsel %vm230, %v225, 0
    %vm243 = vcmask 1043456
    %v245 = vsel %vm243, %v227, 0
    %247 = vmatpush.msra.mxu0 0.0
    %248 = vmatpush.msra.mxu0 0.0
    %249 = vmatpush.msra.mxu0 0.0
    %250 = vmatpush.msra.mxu0 0.0
    %251 = vmatpush.msra.mxu0 0.0
    %252 = vmatpush.msra.mxu0 0.0
    %253 = vmatpush.msra.mxu0 0.0
    %254 = vmatpush.msra.mxu0 0.0
    %255 = vmatpush.msra.mxu0 0.0
    %256 = vmatpush.msra.mxu0 0.0
    %257 = vmatpush.msra.mxu0 0.0
    %258 = vmatpush.msra.mxu0 0.0
    %259 = vmatpush.msra.mxu0 0.0
    %260 = vmatpush.msra.mxu0 0.0
    %261 = vmatpush.msra.mxu0 %v245
    %262 = vmatpush.msra.mxu0 %v226
    %263 = vmatmul.f32.gmra.mxu0 %v232
    %v264 = vpop.f32.mrf.mxu0
    %v265 = vadd.f32 %v229, %v264
    %266 = vmatmul.f32.gmra.mxu0 %v235
    %v267 = vpop.f32.mrf.mxu0
    %v268 = vadd.f32 %v229, %v267
    %269 = vmatmul.f32.gmra.mxu0 %v238
    %v270 = vpop.f32.mrf.mxu0
    %v271 = vadd.f32 %v229, %v270
    %272 = vmatmul.f32.gmra.mxu0 %v241
    %v273 = vpop.f32.mrf.mxu0
    %v274 = vadd.f32 %v229, %v273
    %275 = vdwg.mxu0
    %v276 = vmax.f32 %v265, 0.0
    %v277 = vmax.f32 %v268, 0.0
    %v278 = vmax.f32 %v271, 0.0
    %v279 = vmax.f32 %v274, 0.0
    %280 = vst.msk [vmem:[#allocation2 + $0x2] sm:$0xff] %vm65, %v276
    %281 = vst.msk [vmem:[#allocation2 + $0xa] sm:$0xff] %vm65, %v277
    %282 = vst.msk [vmem:[#allocation2 + $0x12] sm:$0xff] %vm65, %v278
    %283 = vst.msk [vmem:[#allocation2 + $0x1a] sm:$0xff] %vm65, %v279
    %v284 = vld [vmem:[%s153] ss:$2 sm:$0xff]
    %v285 = vld [vmem:[%s155] ss:$2 sm:$0xff]
    %v286 = vld [vmem:[%s161] ss:$2 sm:$0xff]
    %v287 = vld [vmem:[%s163] ss:$2 sm:$0xff]
    %v288 = vld [vmem:[%s169] ss:$2 sm:$0xff]
    %v289 = vld [vmem:[%s171] ss:$2 sm:$0xff]
    %vm290 = vcmp.eq.s32.totalorder %v46, 8
    %vm291 = vcmp.eq.s32.totalorder %v47, 8
    %v292 = vsel %vm290, 0.0, %v284
    %v293 = vsel %vm291, 0.0, %v285
    %296 = vrot.lane.b32.xlu0 %v286, 32
    %v297 = vpop.permute.xlu0 %296
    %298 = vrot.lane.b32.xlu0 %v287, 32
    %v299 = vpop.permute.xlu0 %298
    %304 = vrot.lane.b32.xlu0 %v288, 64
    %v305 = vpop.permute.xlu0 %304
    %306 = vrot.lane.b32.xlu0 %v289, 64
    %v307 = vpop.permute.xlu0 %306
    %v310 = vsel %vm65, %v292, %v297
    %v311 = vsel %vm65, %v293, %v299
    %vm312 = vcmask 523264
    %v313 = vsel %vm312, %v310, %v305
    %v314 = vsel %vm312, %v311, %v307
    %v315 = vld [vmem:[#allocation6 + $0x18] sm:$0xff]
    %v316 = vld [vmem:[#allocation6 + $0x20] sm:$0xff]
    %v317 = vld [vmem:[#allocation6 + $0x28] sm:$0xff]
    %v318 = vld [vmem:[#allocation6 + $0x30] sm:$0xff]
    %v319 = vld [vmem:[#allocation6 + $0x38] sm:$0xff]
    %v320 = vld [vmem:[#allocation6 + $0x40] sm:$0xff]
    %v321 = vld [vmem:[#allocation6 + $0x48] sm:$0xff]
    %v322 = vld [vmem:[#allocation6 + $0x50] sm:$0xff]
    %v323 = vld [vmem:[#allocation6 + $0x58] sm:$0xff]
    %v324 = vld [vmem:[#allocation6 + $0x60] sm:$0xff]
    %v325 = vld [vmem:[#allocation6 + $0x68] sm:$0xff]
    %v326 = vld [vmem:[#allocation6 + $0x70] sm:$0xff]
    %v327 = vld [vmem:[#allocation6 + $0x78] sm:$0x1]
    %v328 = vperm.slane %v327, 0
    %vm329 = vcmask 785408
    %v331 = vsel %vm329, %v313, 0
    %v334 = vsel %vm329, %v314, 0
    %336 = vmatpush.msra.mxu0 0.0
    %337 = vmatpush.msra.mxu0 0.0
    %338 = vmatpush.msra.mxu0 0.0
    %339 = vmatpush.msra.mxu0 0.0
    %340 = vmatpush.msra.mxu0 %v326
    %341 = vmatpush.msra.mxu0 %v325
    %342 = vmatpush.msra.mxu0 %v324
    %343 = vmatpush.msra.mxu0 %v323
    %344 = vmatpush.msra.mxu0 %v322
    %345 = vmatpush.msra.mxu0 %v321
    %346 = vmatpush.msra.mxu0 %v320
    %347 = vmatpush.msra.mxu0 %v319
    %348 = vmatpush.msra.mxu0 %v318
    %349 = vmatpush.msra.mxu0 %v317
    %350 = vmatpush.msra.mxu0 %v316
    %351 = vmatpush.msra.mxu0 %v315
    %352 = vmatmul.f32.gmra.mxu0 %v331
    %v353 = vpop.f32.mrf.mxu0
    %v354 = vadd.f32 %v328, %v353
    %355 = vmatmul.f32.gmra.mxu0 %v334
    %v356 = vpop.f32.mrf.mxu0
    %v357 = vadd.f32 %v328, %v356
    %358 = vdwg.mxu0
    %v359 = vmax.f32 %v354, 0.0
    %v360 = vmax.f32 %v357, 0.0
    %361 = vst.msk [vmem:[#allocation2 + $0x2] sm:$0xff] %vm312, %v359
    %362 = vst.msk [vmem:[#allocation2 + $0xa] sm:$0xff] %vm312, %v360
    %v363 = vld [vmem:[%s153] ss:$2 sm:$0xff]
    %v364 = vld [vmem:[%s161] ss:$2 sm:$0xff]
    %v365 = vld [vmem:[%s169] ss:$2 sm:$0xff]
    %vm366 = vcmp.eq.s32.totalorder %v46, 4
    %v367 = vsel %vm366, 0.0, %v363
    %369 = vrot.lane.b32.xlu0 %v364, 64
    %v370 = vpop.permute.xlu0 %369
    %v372 = vsel %vm312, %v367, %v370
    %v373 = vld [vmem:[#allocation6 + $0x80] sm:$0xff]
    %v374 = vld [vmem:[#allocation6 + $0x88] sm:$0xff]
    %v375 = vld [vmem:[#allocation6 + $0x90] sm:$0xff]
    %v376 = vld [vmem:[#allocation6 + $0x98] sm:$0xff]
    %v377 = vld [vmem:[#allocation6 + $0xa0] sm:$0xff]
    %v378 = vld [vmem:[#allocation6 + $0xa8] sm:$0xff]
    %v379 = vld [vmem:[#allocation6 + $0xb0] sm:$0xff]
    %v380 = vld [vmem:[#allocation6 + $0xb8] sm:$0xff]
    %v381 = vld [vmem:[#allocation6 + $0xc0] sm:$0xff]
    %v382 = vld [vmem:[#allocation6 + $0xc8] sm:$0xff]
    %v383 = vld [vmem:[#allocation6 + $0xd0] sm:$0xff]
    %v384 = vld [vmem:[#allocation6 + $0xd8] sm:$0xff]
    %v385 = vld [vmem:[#allocation6 + $0xe0] sm:$0xff]
    %v386 = vld [vmem:[#allocation6 + $0xe8] sm:$0xff]
    %v387 = vld [vmem:[#allocation6 + $0xf0] sm:$0xff]
    %v388 = vld [vmem:[#allocation6 + $0xf8] sm:$0xff]
    %v389 = vld [vmem:[#allocation6 + $0x100] sm:$0xff]
    %v390 = vld [vmem:[#allocation6 + $0x108] sm:$0xff]
    %v391 = vld [vmem:[#allocation6 + $0x110] sm:$0xff]
    %v392 = vld [vmem:[#allocation6 + $0x118] sm:$0xff]
    %v393 = vld [vmem:[#allocation6 + $0x120] sm:$0xff]
    %v394 = vld [vmem:[#allocation6 + $0x128] sm:$0xff]
    %v395 = vld [vmem:[#allocation6 + $0x130] sm:$0xff]
    %v396 = vld [vmem:[#allocation6 + $0x138] sm:$0xff]
    %v397 = vld [vmem:[#allocation6 + $0x140] sm:$0x1]
    %v398 = vperm.slane %v397, 0
    %v400 = vsel %vm312, %v365, 0
    %402 = vmatpush.msra.mxu0 %v388
    %403 = vmatpush.msra.mxu0 %v387
    %404 = vmatpush.msra.mxu0 %v386
    %405 = vmatpush.msra.mxu0 %v385
    %406 = vmatpush.msra.mxu0 %v384
    %407 = vmatpush.msra.mxu0 %v383
    %408 = vmatpush.msra.mxu0 %v382
    %409 = vmatpush.msra.mxu0 %v381
    %410 = vmatpush.msra.mxu0 %v380
    %411 = vmatpush.msra.mxu0 %v379
    %412 = vmatpush.msra.mxu0 %v378
    %413 = vmatpush.msra.mxu0 %v377
    %414 = vmatpush.msra.mxu0 %v376
    %415 = vmatpush.msra.mxu0 %v375
    %416 = vmatpush.msra.mxu0 %v374
    %417 = vmatpush.msra.mxu0 %v373
    %418 = vmatmul.f32.gmra.mxu0 %v372
    %v419 = vpop.f32.mrf.mxu0
    %v420 = vadd.f32 %v398, %v419
    %421 = vdwg.mxu0
    %422 = vmatpush.msra.mxu0 0.0
    %423 = vmatpush.msra.mxu0 0.0
    %424 = vmatpush.msra.mxu0 0.0
    %425 = vmatpush.msra.mxu0 0.0
    %426 = vmatpush.msra.mxu0 0.0
    %427 = vmatpush.msra.mxu0 0.0
    %428 = vmatpush.msra.mxu0 0.0
    %429 = vmatpush.msra.mxu0 0.0
    %430 = vmatpush.msra.mxu0 %v396
    %431 = vmatpush.msra.mxu0 %v395
    %432 = vmatpush.msra.mxu0 %v394
    %433 = vmatpush.msra.mxu0 %v393
    %434 = vmatpush.msra.mxu0 %v392
    %435 = vmatpush.msra.mxu0 %v391
    %436 = vmatpush.msra.mxu0 %v390
    %437 = vmatpush.msra.mxu0 %v389
    %438 = vmatmul.f32.gmra.mxu0 %v400
    %v439 = vpop.f32.mrf.mxu0
    %v440 = vadd.f32 %v420, %v439
    %441 = vdwg.mxu0
    %v442 = vmax.f32 %v440, 0.0
    %443 = vst.msk [vmem:[#allocation2 + $0x2] sm:$0xff] %vm312, %v442
    %v444 = vld [vmem:[%s153] ss:$2 sm:$0xf]
    %v445 = vld [vmem:[%s161] ss:$2 sm:$0xf]
    %v446 = vld [vmem:[%s169] ss:$2 sm:$0xf]
    %vm447 = vcmp.eq.s32.totalorder %v46, 2
    %v448 = vsel %vm447, 0.0, %v444
    %450 = vrot.lane.b32.xlu0 %v445, 64
    %v451 = vpop.permute.xlu0 %450
    %v453 = vsel %vm312, %v448, %v451
    %v454 = vld [vmem:[#allocation6 + $0x148] sm:$0xff]
    %v455 = vld [vmem:[#allocation6 + $0x150] sm:$0xff]
    %v456 = vld [vmem:[#allocation6 + $0x158] sm:$0xff]
    %v457 = vld [vmem:[#allocation6 + $0x160] sm:$0xff]
    %v458 = vld [vmem:[#allocation6 + $0x168] sm:$0xff]
    %v459 = vld [vmem:[#allocation6 + $0x170] sm:$0xff]
    %v460 = vld [vmem:[#allocation6 + $0x178] sm:$0xff]
    %v461 = vld [vmem:[#allocation6 + $0x180] sm:$0xff]
    %v462 = vld [vmem:[#allocation6 + $0x188] sm:$0xff]
    %v463 = vld [vmem:[#allocation6 + $0x190] sm:$0xff]
    %v464 = vld [vmem:[#allocation6 + $0x198] sm:$0xff]
    %v465 = vld [vmem:[#allocation6 + $0x1a0] sm:$0xff]
    %v466 = vld [vmem:[#allocation6 + $0x1a8] sm:$0xff]
    %v467 = vld [vmem:[#allocation6 + $0x1b0] sm:$0xff]
    %v468 = vld [vmem:[#allocation6 + $0x1b8] sm:$0xff]
    %v469 = vld [vmem:[#allocation6 + $0x1c0] sm:$0xff]
    %v470 = vld [vmem:[#allocation6 + $0x1c8] sm:$0xff]
    %v471 = vld [vmem:[#allocation6 + $0x1d0] sm:$0xff]
    %v472 = vld [vmem:[#allocation6 + $0x1d8] sm:$0xff]
    %v473 = vld [vmem:[#allocation6 + $0x1e0] sm:$0xff]
    %v474 = vld [vmem:[#allocation6 + $0x1e8] sm:$0xff]
    %v475 = vld [vmem:[#allocation6 + $0x1f0] sm:$0xff]
    %v476 = vld [vmem:[#allocation6 + $0x1f8] sm:$0xff]
    %v477 = vld [vmem:[#allocation6 + $0x200] sm:$0xff]
    %v478 = vld [vmem:[#allocation6 + $0x208] sm:$0x1]
    %v479 = vperm.slane %v478, 0
    %v481 = vsel %vm312, %v446, 0
    %483 = vmatpush.msra.mxu0 %v469
    %484 = vmatpush.msra.mxu0 %v468
    %485 = vmatpush.msra.mxu0 %v467
    %486 = vmatpush.msra.mxu0 %v466
    %487 = vmatpush.msra.mxu0 %v465
    %488 = vmatpush.msra.mxu0 %v464
    %489 = vmatpush.msra.mxu0 %v463
    %490 = vmatpush.msra.mxu0 %v462
    %491 = vmatpush.msra.mxu0 %v461
    %492 = vmatpush.msra.mxu0 %v460
    %493 = vmatpush.msra.mxu0 %v459
    %494 = vmatpush.msra.mxu0 %v458
    %495 = vmatpush.msra.mxu0 %v457
    %496 = vmatpush.msra.mxu0 %v456
    %497 = vmatpush.msra.mxu0 %v455
    %498 = vmatpush.msra.mxu0 %v454
    %499 = vmatmul.f32.gmra.mxu0 %v453
    %v500 = vpop.f32.mrf.mxu0
    %v501 = vadd.f32 %v479, %v500
    %502 = vdwg.mxu0
    %503 = vmatpush.msra.mxu0 0.0
    %504 = vmatpush.msra.mxu0 0.0
    %505 = vmatpush.msra.mxu0 0.0
    %506 = vmatpush.msra.mxu0 0.0
    %507 = vmatpush.msra.mxu0 0.0
    %508 = vmatpush.msra.mxu0 0.0
    %509 = vmatpush.msra.mxu0 0.0
    %510 = vmatpush.msra.mxu0 0.0
    %511 = vmatpush.msra.mxu0 %v477
    %512 = vmatpush.msra.mxu0 %v476
    %513 = vmatpush.msra.mxu0 %v475
    %514 = vmatpush.msra.mxu0 %v474
    %515 = vmatpush.msra.mxu0 %v473
    %516 = vmatpush.msra.mxu0 %v472
    %517 = vmatpush.msra.mxu0 %v471
    %518 = vmatpush.msra.mxu0 %v470
    %519 = vmatmul.f32.gmra.mxu0 %v481
    %v520 = vpop.f32.mrf.mxu0
    %v521 = vadd.f32 %v501, %v520
    %522 = vdwg.mxu0
    %v523 = vmax.f32 %v521, 0.0
    %524 = vst [vmem:[#allocation2 + $0x2] sm:$0xf] %v523
    %v525 = vld [vmem:[%s161] ss:$2 sm:$0x3]
    %v526 = vld [vmem:[%s169] ss:$2 sm:$0x3]
    %v527 = vld [vmem:[#allocation6 + $0x210] sm:$0xff]
    %v528 = vld [vmem:[#allocation6 + $0x218] sm:$0xff]
    %v529 = vld [vmem:[#allocation6 + $0x220] sm:$0xff]
    %v530 = vld [vmem:[#allocation6 + $0x228] sm:$0xff]
    %v531 = vld [vmem:[#allocation6 + $0x230] sm:$0xff]
    %v532 = vld [vmem:[#allocation6 + $0x238] sm:$0xff]
    %v533 = vld [vmem:[#allocation6 + $0x240] sm:$0xff]
    %v534 = vld [vmem:[#allocation6 + $0x248] sm:$0xff]
    %v535 = vld [vmem:[#allocation6 + $0x250] sm:$0xff]
    %v536 = vld [vmem:[#allocation6 + $0x258] sm:$0xff]
    %v537 = vld [vmem:[#allocation6 + $0x260] sm:$0xff]
    %v538 = vld [vmem:[#allocation6 + $0x268] sm:$0xff]
    %v539 = vld [vmem:[#allocation6 + $0x270] sm:$0xff]
    %v540 = vld [vmem:[#allocation6 + $0x278] sm:$0xff]
    %v541 = vld [vmem:[#allocation6 + $0x280] sm:$0xff]
    %v542 = vld [vmem:[#allocation6 + $0x288] sm:$0xff]
    %v543 = vld [vmem:[#allocation6 + $0x290] sm:$0xff]
    %v544 = vld [vmem:[#allocation6 + $0x298] sm:$0xff]
    %v545 = vld [vmem:[#allocation6 + $0x2a0] sm:$0xff]
    %v546 = vld [vmem:[#allocation6 + $0x2a8] sm:$0xff]
    %v547 = vld [vmem:[#allocation6 + $0x2b0] sm:$0xff]
    %v548 = vld [vmem:[#allocation6 + $0x2b8] sm:$0xff]
    %v549 = vld [vmem:[#allocation6 + $0x2c0] sm:$0xff]
    %v550 = vld [vmem:[#allocation6 + $0x2c8] sm:$0xff]
    %v551 = vld [vmem:[#allocation6 + $0x2d0] sm:$0xff]
    %v552 = vld [vmem:[#allocation6 + $0x2d8] sm:$0xff]
    %v553 = vld [vmem:[#allocation6 + $0x2e0] sm:$0xff]
    %v554 = vld [vmem:[#allocation6 + $0x2e8] sm:$0xff]
    %v555 = vld [vmem:[#allocation6 + $0x2f0] sm:$0xff]
    %v556 = vld [vmem:[#allocation6 + $0x2f8] sm:$0xff]
    %v557 = vld [vmem:[#allocation6 + $0x300] sm:$0xff]
    %v558 = vld [vmem:[#allocation6 + $0x308] sm:$0xff]
    %v559 = vld [vmem:[#allocation6 + $0x310] sm:$0x1]
    %v560 = vperm.slane %v559, 0
    %561 = vmatpush.msra.mxu0 %v542
    %562 = vmatpush.msra.mxu0 %v541
    %563 = vmatpush.msra.mxu0 %v540
    %564 = vmatpush.msra.mxu0 %v539
    %565 = vmatpush.msra.mxu0 %v538
    %566 = vmatpush.msra.mxu0 %v537
    %567 = vmatpush.msra.mxu0 %v536
    %568 = vmatpush.msra.mxu0 %v535
    %569 = vmatpush.msra.mxu0 %v534
    %570 = vmatpush.msra.mxu0 %v533
    %571 = vmatpush.msra.mxu0 %v532
    %572 = vmatpush.msra.mxu0 %v531
    %573 = vmatpush.msra.mxu0 %v530
    %574 = vmatpush.msra.mxu0 %v529
    %575 = vmatpush.msra.mxu0 %v528
    %576 = vmatpush.msra.mxu0 %v527
    %577 = vmatmul.f32.gmra.mxu0 %v525
    %v578 = vpop.f32.mrf.mxu0
    %v579 = vadd.f32 %v560, %v578
    %580 = vdwg.mxu0
    %581 = vmatpush.msra.mxu0 %v558
    %582 = vmatpush.msra.mxu0 %v557
    %583 = vmatpush.msra.mxu0 %v556
    %584 = vmatpush.msra.mxu0 %v555
    %585 = vmatpush.msra.mxu0 %v554
    %586 = vmatpush.msra.mxu0 %v553
    %587 = vmatpush.msra.mxu0 %v552
    %588 = vmatpush.msra.mxu0 %v551
    %589 = vmatpush.msra.mxu0 %v550
    %590 = vmatpush.msra.mxu0 %v549
    %591 = vmatpush.msra.mxu0 %v548
    %592 = vmatpush.msra.mxu0 %v547
    %593 = vmatpush.msra.mxu0 %v546
    %594 = vmatpush.msra.mxu0 %v545
    %595 = vmatpush.msra.mxu0 %v544
    %596 = vmatpush.msra.mxu0 %v543
    %597 = vmatmul.f32.gmra.mxu0 %v526
    %v598 = vpop.f32.mrf.mxu0
    %v599 = vadd.f32 %v579, %v598
    %600 = vdwg.mxu0
    %vm601 = vcmask 58368
    %602 = vst.msk [vmem:[#allocation8] sm:$0x3] %vm601, %v599
    // Predicated region
    $region18: #{create_forward.1} parent=1 // pred_check
      _
    $region19: #{create_forward.1} parent=1 // pred_check_branch
      %604 = sbr.rel (0) target = $region21
    $region20: #{create_forward.1} parent=1 // pred_region
      %606 = vsyncadd [#allocation5], 0
      %s608 = sshll.u32 [#allocation8], 4
      %s609 = int_to_ptr.vmem [resolvable:$true] %s608
      %s610 = sshll.u32 %s2, 4
      %s611 = int_to_ptr.hbm [resolvable:$true] %s610
      %613 = dma.vmem_to_hbm [thread:$0]  %s609, 32, %s611, [#allocation5]
    $region21: #{create_forward.1} parent=1 // pred_fallthru
      _
    // Predicated region
    $region22: #{create_forward.1} parent=1 // pred_check
      _
    $region23: #{create_forward.1} parent=1 // pred_check_branch
      %615 = sbr.rel (0) target = $region25
    $region24: #{create_forward.1} parent=1 // pred_region
      %617 = dma.done [#allocation5], 32
    $region25: #{create_forward.1} parent=1 // pred_fallthru
      _
    %618 = vsyncpa [#allocation4], 1
    %619 = vsyncpa [#allocation7], 1
    %620 = vsyncpa [#allocation5], 1

</llo_original>
